<compile_context>
chip_gen: v7x
topology: tpu7x:2x2x1
jax: 0.10.0
libtpu: 0.0.40
codegen_flags: <defaults>
</compile_context>

<pallas_src>
import math

import jax
import jax.numpy as jnp
from jax.experimental import pallas as pl
from jax.experimental.pallas import tpu as pltpu


# ---------------------------------------------------------------------------
# Pallas kernel: fused CLS attention + LayerNorm + classifier, one batch block
# ---------------------------------------------------------------------------
def fusion_head_kernel(xkv_ref, xq_ref, bias_ref, wproj_ref, wc_ref, vec_ref,
                       out_ref):
    Bb = out_ref.shape[0]          # batch items in this block
    S = bias_ref.shape[2]          # sequence length
    D = xq_ref.shape[2]            # feature dim
    Lp = out_ref.shape[2]          # padded (lane-dense) label count

    # K/V projection for every token: fused (Bb*S, D) @ (D, 2D) MXU matmul,
    # f32 accumulation, bias from the packed vector block.
    kv = (jnp.dot(xkv_ref[...], wproj_ref[:, :2 * D],
                  preferred_element_type=jnp.float32)
          + vec_ref[0:1, :2 * D])                                  # (Bb*S, 2D)

    # Q projection for the CLS row only (1/temperature folded into weights).
    q = (jnp.dot(xq_ref[:, 0, :], wproj_ref[:, 2 * D:],
                 preferred_element_type=jnp.float32)
         + vec_ref[1:2, :D])                                       # (Bb, D)

    # bf16 K/V halves the live VMEM footprint; reductions below run on MXU.
    kv3 = kv.astype(jnp.bfloat16).reshape(Bb, S, 2 * D)
    k = kv3[:, :, :D]
    v = kv3[:, :, D:]        # lane-aligned when D % 128 == 0 (prod feat_dim)
    q3 = q.astype(jnp.bfloat16)[:, None, :]                        # (Bb, 1, D)

    # CLS-row scores + additive mask bias (0 / -1e9); softmax in f32, with
    # the normalization on the EUP reciprocal slot.
    s = jnp.einsum('bqd,bkd->bqk', q3, k,
                   preferred_element_type=jnp.float32) + bias_ref[...]
    m = jnp.max(s, axis=-1, keepdims=True)
    p = jnp.exp(s - m)
    p = p * pl.reciprocal(jnp.sum(p, axis=-1, keepdims=True), approx=True)

    # Weighted value sum (MXU, bf16 operands, f32 accumulation).
    o = jnp.einsum('bqk,bkd->bqd', p.astype(jnp.bfloat16), v,
                   preferred_element_type=jnp.float32)[:, 0, :]    # (Bb, D)

    # LayerNorm(eps=1e-6); beta is pre-folded into the classifier bias.
    mu = jnp.mean(o, axis=-1, keepdims=True)
    var = jnp.mean((o - mu) ** 2, axis=-1, keepdims=True)
    nhat = (o - mu) * jax.lax.rsqrt(var + 1e-6) * vec_ref[2:3, :D]

    # Classifier -> lane-dense padded (Bb, Lp) slab.
    out_ref[:, 0, :] = (jnp.dot(nhat.astype(jnp.bfloat16), wc_ref[...],
                                preferred_element_type=jnp.float32)
                        + vec_ref[3:4, :Lp])


def _pick_block_b(B, S):
    """Largest divisor of B giving >= 2 grid steps (DMA pipelining + v7x
    dual-TC), ~4 steps for large batches, keeping block_b*S a sublane (8)
    multiple so the flattened-token block obeys the (8,128) tiling rule.
    For very large blocks on v7x (64 MiB VMEM) halve this again."""
    if B < 2:
        return B
    target = max(1, min(B // 2, max(8, B // 4)))
    best = None
    for bb in range(target, 0, -1):
        if B % bb != 0:
            continue
        if best is None:
            best = bb
        if (bb * S) % 8 == 0:
            return bb
    # No sublane-aligned divisor: fall back to the whole batch (correct,
    # just unpipelined).
    return B if best is None or (best * S) % 8 != 0 else best


def fusion_head(tokens_flat, cls_tokens, attn_bias, fused, *, block_b=None):
    """tokens_flat: (B*S, D) bf16; cls_tokens: (B,1,D) bf16;
    attn_bias: (B,1,S) f32.  Returns (B, Lp) f32 padded logits."""
    B = cls_tokens.shape[0]
    S = attn_bias.shape[2]
    D = cls_tokens.shape[2]
    Lp = fused["wc"].shape[1]
    W = fused["vecs"].shape[1]

    if block_b is None:
        block_b = _pick_block_b(B, S)
    assert B % block_b == 0
    nb = B // block_b

    flops = 2 * B * (S * D * 2 * D + D * D + 2 * S * D + D * Lp)
    bytes_accessed = ((tokens_flat.size + cls_tokens.size) * 2
                      + attn_bias.size * 4
                      + (fused["wproj"].size + fused["wc"].size) * 2
                      + fused["vecs"].size * 4 + B * Lp * 4)

    grid_spec = pltpu.PrefetchScalarGridSpec(
        num_scalar_prefetch=0,
        grid=(nb,),
        in_specs=[
            pl.BlockSpec((block_b * S, D), lambda i: (i, 0)),    # tokens (flat)
            pl.BlockSpec((block_b, 1, D), lambda i: (i, 0, 0)),  # CLS rows
            pl.BlockSpec((block_b, 1, S), lambda i: (i, 0, 0)),  # mask bias
            pl.BlockSpec((D, 3 * D), lambda i: (0, 0)),          # [Wk|Wv|Wq/T]
            pl.BlockSpec((D, Lp), lambda i: (0, 0)),             # classifier W
            pl.BlockSpec((4, W), lambda i: (0, 0)),              # packed vectors
        ],
        out_specs=pl.BlockSpec((block_b, 1, Lp), lambda i: (i, 0, 0)),
    )

    out = pl.pallas_call(
        fusion_head_kernel,
        out_shape=jax.ShapeDtypeStruct((B, 1, Lp), jnp.float32),
        grid_spec=grid_spec,
        compiler_params=pltpu.CompilerParams(
            dimension_semantics=("parallel",)),
        cost_estimate=pl.CostEstimate(flops=flops, transcendentals=B * S,
                                      bytes_accessed=bytes_accessed),
    )(tokens_flat, cls_tokens, attn_bias,
      fused["wproj"], fused["wc"], fused["vecs"])
    return out[:, 0, :]


# ---------------------------------------------------------------------------
# Parameter init (deterministic, mirrors MyModel.init_weights shapes)
# ---------------------------------------------------------------------------
def xavier_uniform(key, shape):
    fan_in, fan_out = shape[0], shape[1]
    limit = math.sqrt(6.0 / (fan_in + fan_out))
    return jax.random.uniform(key, shape, jnp.float32, -limit, limit)


def uniform_1d(key, n):
    stdv = 1.0 / math.sqrt(n)
    return jax.random.uniform(key, (1, n), jnp.float32, -stdv, stdv)


def init_params(key, feat_dim, label_num):
    ks = jax.random.split(key, 12)
    return {
        "cls_token": xavier_uniform(ks[0], (1, feat_dim)).reshape(1, 1, feat_dim),
        "friend_emb": xavier_uniform(ks[1], (label_num + 1, feat_dim)),
        "wq": xavier_uniform(ks[2], (feat_dim, feat_dim)),
        "bq": uniform_1d(ks[3], feat_dim),
        "wk": xavier_uniform(ks[4], (feat_dim, feat_dim)),
        "bk": uniform_1d(ks[5], feat_dim),
        "wv": xavier_uniform(ks[6], (feat_dim, feat_dim)),
        "bv": uniform_1d(ks[7], feat_dim),
        "ln_g": uniform_1d(ks[8], feat_dim),
        "ln_b": uniform_1d(ks[9], feat_dim),
        "wc": xavier_uniform(ks[10], (feat_dim, label_num)),
        "bc": uniform_1d(ks[11], label_num),
    }


def prepare_fused_params(params):
    """One-time weight fusion (hoisted out of the forward pass)."""
    D = params["wq"].shape[0]
    L = params["wc"].shape[1]
    Lp = ((L + 127) // 128) * 128
    temperature = float(D) ** 2          # reference: feat_dim ** 2

    # [Wk | Wv | Wq/T] so K/V come from one fused matmul and Q is last.
    wproj = jnp.concatenate(
        [params["wk"], params["wv"], params["wq"] / temperature], axis=1)
    wc_pad = jnp.zeros((D, Lp), jnp.float32).at[:, :L].set(params["wc"])
    # Fold LayerNorm beta into the classifier bias:
    # (nhat*g + beta) @ Wc + bc == (nhat*g) @ Wc + (beta @ Wc + bc)
    bc_eff = params["ln_b"] @ params["wc"] + params["bc"]          # (1, L)

    W = max(2 * D, Lp)
    vecs = jnp.zeros((4, W), jnp.float32)
    vecs = vecs.at[0, :2 * D].set(
        jnp.concatenate([params["bk"], params["bv"]], axis=1)[0])  # [bk|bv]
    vecs = vecs.at[1, :D].set(params["bq"][0] / temperature)       # bq/T
    vecs = vecs.at[2, :D].set(params["ln_g"][0])                   # gamma
    vecs = vecs.at[3, :L].set(bc_eff[0])                           # beta@Wc+bc

    return {
        "wproj": wproj.astype(jnp.bfloat16),
        "wc": wc_pad.astype(jnp.bfloat16),
        "vecs": vecs,
        "label_num": L,
        "feat_dim": D,
    }


# ---------------------------------------------------------------------------
# Full forward (JAX glue around the Pallas hot path)
# ---------------------------------------------------------------------------
def build_tokens_and_mask(params, profile_pooler_output, friend_label_id,
                          friend_label_mask):
    B, D = profile_pooler_output.shape
    profile_token = profile_pooler_output[:, None, :]
    friend_token = jnp.take(params["friend_emb"], friend_label_id, axis=0)
    cls_token = jnp.broadcast_to(params["cls_token"], (B, 1, D))
    final_token = jnp.concatenate([cls_token, profile_token, friend_token], 1)
    mask = jnp.concatenate([jnp.ones((B, 2), jnp.float32),
                            friend_label_mask.astype(jnp.float32)], axis=1)
    return final_token, mask


def my_model_forward(params, fused, profile_pooler_output, friend_label_id,
                     friend_label_mask):
    # TODO(synk): BertModel.from_pretrained('./mbert') has no Pallas
    # equivalent; profile_pooler_output (B, D) stands in for its pooler_output.
    final_token, mask = build_tokens_and_mask(
        params, profile_pooler_output, friend_label_id, friend_label_mask)
    B, S, D = final_token.shape

    # Additive mask bias: 0 where attended, -1e9 where masked (mask == 0).
    attn_bias = jnp.where(mask != 0.0, 0.0, -1.0e9).astype(jnp.float32)
    attn_bias = attn_bias[:, None, :]                              # (B, 1, S)

    tokens = final_token.astype(jnp.bfloat16)
    tokens_flat = tokens.reshape(B * S, D)     # flatten in XLA, not in-kernel
    cls_rows = tokens[:, 0:1, :]               # CLS query rows (B, 1, D)

    logits_pad = fusion_head(tokens_flat, cls_rows, attn_bias, fused)
    return logits_pad[:, :fused["label_num"]]


def reference_logits(params, final_token, mask):
    """Pure-JAX f32 reference of the PyTorch head (eval mode)."""
    D = final_token.shape[-1]
    temperature = float(D) ** 2
    q = final_token @ params["wq"] + params["bq"]
    k = final_token @ params["wk"] + params["bk"]
    v = final_token @ params["wv"] + params["bv"]
    attn = jnp.einsum('bqd,bkd->bqk', q / temperature, k)
    attn = jnp.where(mask[:, None, :] == 0.0, -1.0e9, attn)
    attn = jax.nn.softmax(attn, axis=-1)
    out = jnp.einsum('bqk,bkd->bqd', attn, v)
    mu = out.mean(-1, keepdims=True)
    var = ((out - mu) ** 2).mean(-1, keepdims=True)
    normed = (out - mu) / jnp.sqrt(var + 1e-6) * params["ln_g"] + params["ln_b"]
    return normed[:, 0, :] @ params["wc"] + params["bc"]


if __name__ == "__main__":
    feat_dim = 32
    label_num = 8
    bsz = 2
    num_friends = 6          # sequence length S = num_friends + 2 = 8

    key = jax.random.PRNGKey(0)
    k_params, k_pool, k_ids = jax.random.split(key, 3)

    params = init_params(k_params, feat_dim, label_num)
    fused = prepare_fused_params(params)   # hoisted: built once, reused

    profile_pooler_output = jax.random.normal(k_pool, (bsz, feat_dim),
                                              jnp.float32)
    friend_label_id = jax.random.randint(k_ids, (bsz, num_friends), 0,
                                         label_num + 1)
    friend_label_mask = jnp.array([[1, 1, 1, 1, 1, 1],
                                   [1, 1, 1, 1, 0, 0]], dtype=jnp.float32)

    logits = my_model_forward(params, fused, profile_pooler_output,
                              friend_label_id, friend_label_mask)
    jax.block_until_ready(logits)
    assert logits.shape == (bsz, label_num)

    # Pure-JAX f32 reference (kernel uses bf16 MXU operands + approx
    # reciprocal, so tolerance is loose).
    final_token, mask = build_tokens_and_mask(
        params, profile_pooler_output, friend_label_id, friend_label_mask)
    ref = reference_logits(params, final_token, mask)
    assert float(jnp.max(jnp.abs(logits - ref))) < 0.2

    print("KERNEL_OK")
</pallas_src>

<mosaic_0001>
module attributes {stable_mosaic.version = 11 : i64} {
  func.func @fusion_head_kernel(%arg0: i32, %arg1: memref<8x32xbf16, #tpu.memory_space<vmem>>, %arg2: memref<1x1x32xbf16, #tpu.memory_space<vmem>>, %arg3: memref<1x1x8xf32, #tpu.memory_space<vmem>>, %arg4: memref<32x96xbf16, #tpu.memory_space<vmem>>, %arg5: memref<32x128xbf16, #tpu.memory_space<vmem>>, %arg6: memref<4x128xf32, #tpu.memory_space<vmem>>, %arg7: memref<1x1x128xf32, #tpu.memory_space<vmem>>) attributes {dimension_semantics = [#tpu.dimension_semantics<parallel>], iteration_bounds = array<i64: 2>, scalar_prefetch = 0 : i64, scratch_operands = 0 : i64, tpu.core_type = #tpu.core_type<tc>, window_params = [{transform_indices = @transform_0, window_bounds = array<i64: 8, 32>}, {transform_indices = @transform_1, window_bounds = array<i64: 1, 1, 32>}, {transform_indices = @transform_2, window_bounds = array<i64: 1, 1, 8>}, {pipeline_mode = #tpu.pipeline_mode<synchronous>, transform_indices = @transform_3, window_bounds = array<i64: 32, 96>}, {pipeline_mode = #tpu.pipeline_mode<synchronous>, transform_indices = @transform_4, window_bounds = array<i64: 32, 128>}, {pipeline_mode = #tpu.pipeline_mode<synchronous>, transform_indices = @transform_5, window_bounds = array<i64: 4, 128>}, {transform_indices = @transform_6, window_bounds = array<i64: 1, 1, 128>}]} {
    %c0 = arith.constant 0 : index
    %c0_0 = arith.constant 0 : index
    %0 = vector.load %arg1[%c0, %c0_0] : memref<8x32xbf16, #tpu.memory_space<vmem>>, vector<8x32xbf16>
    %c0_1 = arith.constant 0 : index
    %c0_2 = arith.constant 0 : index
    %1 = vector.load %arg4[%c0_1, %c0_2] : memref<32x96xbf16, #tpu.memory_space<vmem>>, vector<32x64xbf16>
    %cst = arith.constant dense<0.000000e+00> : vector<8x64xf32>
    %2 = tpu.matmul %0, %1, %cst {dimension_numbers = #tpu.dot_dimension_numbers<[1], [0], [0], [1], [0, 0, 1, 1], [], []>} : vector<8x32xbf16>, vector<32x64xbf16>, vector<8x64xf32> -> vector<8x64xf32>
    %c0_3 = arith.constant 0 : index
    %c0_4 = arith.constant 0 : index
    %3 = vector.load %arg6[%c0_3, %c0_4] : memref<4x128xf32, #tpu.memory_space<vmem>>, vector<1x64xf32>
    %4 = vector.broadcast %3 : vector<1x64xf32> to vector<8x64xf32>
    %5 = arith.addf %2, %4 : vector<8x64xf32>
    %c0_5 = arith.constant 0 : index
    %c0_6 = arith.constant 0 : index
    %c0_7 = arith.constant 0 : index
    %6 = vector.load %arg2[%c0_5, %c0_6, %c0_7] : memref<1x1x32xbf16, #tpu.memory_space<vmem>>, vector<1x1x32xbf16>
    %7 = vector.shape_cast %6 : vector<1x1x32xbf16> to vector<1x32xbf16>
    %c0_8 = arith.constant 0 : index
    %c64 = arith.constant 64 : index
    %8 = vector.load %arg4[%c0_8, %c64] : memref<32x96xbf16, #tpu.memory_space<vmem>>, vector<32x32xbf16>
    %cst_9 = arith.constant dense<0.000000e+00> : vector<1x32xf32>
    %9 = tpu.matmul %7, %8, %cst_9 {dimension_numbers = #tpu.dot_dimension_numbers<[1], [0], [0], [1], [0, 0, 1, 1], [], []>} : vector<1x32xbf16>, vector<32x32xbf16>, vector<1x32xf32> -> vector<1x32xf32>
    %c1 = arith.constant 1 : index
    %c0_10 = arith.constant 0 : index
    %10 = vector.load %arg6[%c1, %c0_10] : memref<4x128xf32, #tpu.memory_space<vmem>>, vector<1x32xf32>
    %11 = arith.addf %9, %10 : vector<1x32xf32>
    %12 = arith.truncf %5 : vector<8x64xf32> to vector<8x64xbf16>
    %13 = vector.shape_cast %12 : vector<8x64xbf16> to vector<1x8x64xbf16>
    %14 = vector.extract_strided_slice %13 {offsets = [0, 0, 0], sizes = [1, 8, 32], strides = [1, 1, 1]} : vector<1x8x64xbf16> to vector<1x8x32xbf16>
    %15 = vector.extract_strided_slice %13 {offsets = [0, 0, 32], sizes = [1, 8, 32], strides = [1, 1, 1]} : vector<1x8x64xbf16> to vector<1x8x32xbf16>
    %16 = arith.truncf %11 : vector<1x32xf32> to vector<1x32xbf16>
    %17 = vector.shape_cast %16 : vector<1x32xbf16> to vector<1x1x32xbf16>
    "tpu.trace_start"() <{level = 10 : i32, message = "bqd,bkd->bqk"}> : () -> ()
    %cst_11 = arith.constant dense<0.000000e+00> : vector<1x1x8xf32>
    %18 = tpu.matmul %17, %14, %cst_11 {dimension_numbers = #tpu.dot_dimension_numbers<[2], [2], [1], [1], [0, 0, 0, 1, 1, 1], [0], [0]>} : vector<1x1x32xbf16>, vector<1x8x32xbf16>, vector<1x1x8xf32> -> vector<1x1x8xf32>
    "tpu.trace_stop"() : () -> ()
    %c0_12 = arith.constant 0 : index
    %c0_13 = arith.constant 0 : index
    %c0_14 = arith.constant 0 : index
    %19 = vector.load %arg3[%c0_12, %c0_13, %c0_14] : memref<1x1x8xf32, #tpu.memory_space<vmem>>, vector<1x1x8xf32>
    %20 = arith.addf %18, %19 : vector<1x1x8xf32>
    %cst_15 = arith.constant dense<0xFF800000> : vector<1x1xf32>
    %21 = vector.multi_reduction <maximumf>, %20, %cst_15 [2] : vector<1x1x8xf32> to vector<1x1xf32>
    %22 = vector.shape_cast %21 : vector<1x1xf32> to vector<1x1x1xf32>
    %23 = vector.broadcast %22 : vector<1x1x1xf32> to vector<1x1x8xf32>
    %24 = arith.subf %20, %23 : vector<1x1x8xf32>
    %25 = math.exp %24 : vector<1x1x8xf32>
    %cst_16 = arith.constant dense<0.000000e+00> : vector<1x1xf32>
    %26 = vector.multi_reduction <add>, %25, %cst_16 [2] : vector<1x1x8xf32> to vector<1x1xf32>
    %27 = vector.shape_cast %26 : vector<1x1xf32> to vector<1x1x1xf32>
    %28 = tpu.reciprocal %27 {approx = true} : vector<1x1x1xf32> -> vector<1x1x1xf32>
    %29 = vector.broadcast %28 : vector<1x1x1xf32> to vector<1x1x8xf32>
    %30 = arith.mulf %25, %29 : vector<1x1x8xf32>
    %31 = arith.truncf %30 : vector<1x1x8xf32> to vector<1x1x8xbf16>
    "tpu.trace_start"() <{level = 10 : i32, message = "bqk,bkd->bqd"}> : () -> ()
    %cst_17 = arith.constant dense<0.000000e+00> : vector<1x1x32xf32>
    %32 = tpu.matmul %31, %15, %cst_17 {dimension_numbers = #tpu.dot_dimension_numbers<[2], [1], [1], [2], [0, 0, 0, 1, 1, 2], [0], [0]>} : vector<1x1x8xbf16>, vector<1x8x32xbf16>, vector<1x1x32xf32> -> vector<1x1x32xf32>
    "tpu.trace_stop"() : () -> ()
    %33 = vector.shape_cast %32 : vector<1x1x32xf32> to vector<1x32xf32>
    %cst_18 = arith.constant dense<0.000000e+00> : vector<1xf32>
    %34 = vector.multi_reduction <add>, %33, %cst_18 [1] : vector<1x32xf32> to vector<1xf32>
    %35 = vector.shape_cast %34 : vector<1xf32> to vector<1x1xf32>
    %cst_19 = arith.constant 3.200000e+01 : f32
    %36 = vector.broadcast %cst_19 : f32 to vector<1x1xf32>
    %37 = arith.divf %35, %36 : vector<1x1xf32>
    %38 = vector.broadcast %37 : vector<1x1xf32> to vector<1x32xf32>
    %39 = arith.subf %33, %38 : vector<1x32xf32>
    %40 = arith.mulf %39, %39 : vector<1x32xf32>
    %cst_20 = arith.constant dense<0.000000e+00> : vector<1xf32>
    %41 = vector.multi_reduction <add>, %40, %cst_20 [1] : vector<1x32xf32> to vector<1xf32>
    %42 = vector.shape_cast %41 : vector<1xf32> to vector<1x1xf32>
    %cst_21 = arith.constant 3.200000e+01 : f32
    %43 = vector.broadcast %cst_21 : f32 to vector<1x1xf32>
    %44 = arith.divf %42, %43 : vector<1x1xf32>
    %45 = vector.broadcast %37 : vector<1x1xf32> to vector<1x32xf32>
    %46 = arith.subf %33, %45 : vector<1x32xf32>
    %cst_22 = arith.constant 9.99999997E-7 : f32
    %47 = vector.broadcast %cst_22 : f32 to vector<1x1xf32>
    %48 = arith.addf %44, %47 : vector<1x1xf32>
    %49 = math.rsqrt %48 : vector<1x1xf32>
    %50 = vector.broadcast %49 : vector<1x1xf32> to vector<1x32xf32>
    %51 = arith.mulf %46, %50 : vector<1x32xf32>
    %c2 = arith.constant 2 : index
    %c0_23 = arith.constant 0 : index
    %52 = vector.load %arg6[%c2, %c0_23] : memref<4x128xf32, #tpu.memory_space<vmem>>, vector<1x32xf32>
    %53 = arith.mulf %51, %52 : vector<1x32xf32>
    %54 = arith.truncf %53 : vector<1x32xf32> to vector<1x32xbf16>
    %c0_24 = arith.constant 0 : index
    %c0_25 = arith.constant 0 : index
    %55 = vector.load %arg5[%c0_24, %c0_25] : memref<32x128xbf16, #tpu.memory_space<vmem>>, vector<32x128xbf16>
    %cst_26 = arith.constant dense<0.000000e+00> : vector<1x128xf32>
    %56 = tpu.matmul %54, %55, %cst_26 {dimension_numbers = #tpu.dot_dimension_numbers<[1], [0], [0], [1], [0, 0, 1, 1], [], []>} : vector<1x32xbf16>, vector<32x128xbf16>, vector<1x128xf32> -> vector<1x128xf32>
    %c3 = arith.constant 3 : index
    %c0_27 = arith.constant 0 : index
    %57 = vector.load %arg6[%c3, %c0_27] : memref<4x128xf32, #tpu.memory_space<vmem>>, vector<1x128xf32>
    %58 = arith.addf %56, %57 : vector<1x128xf32>
    %c0_28 = arith.constant 0 : index
    %c0_29 = arith.constant 0 : index
    %c0_30 = arith.constant 0 : index
    %59 = vector.load %arg7[%c0_28, %c0_29, %c0_30] : memref<1x1x128xf32, #tpu.memory_space<vmem>>, vector<1x1x128xf32>
    %60 = vector.shape_cast %59 : vector<1x1x128xf32> to vector<1x128xf32>
    %61 = vector.shape_cast %58 : vector<1x128xf32> to vector<1x1x128xf32>
    tpu.vector_store %arg7[%c0_28, %c0_29, %c0_30], %61 {strides = array<i32>} : memref<1x1x128xf32, #tpu.memory_space<vmem>>, vector<1x1x128xf32>,
    return
  }
  func.func @transform_0(%arg0: i32) -> (i32, i32) {
    %c0_i32 = arith.constant 0 : i32
    %c0_i32_0 = arith.constant 0 : i32
    return %arg0, %c0_i32 : i32, i32
  }
  func.func @transform_1(%arg0: i32) -> (i32, i32, i32) {
    %c0_i32 = arith.constant 0 : i32
    %c0_i32_0 = arith.constant 0 : i32
    %c0_i32_1 = arith.constant 0 : i32
    return %arg0, %c0_i32, %c0_i32_0 : i32, i32, i32
  }
  func.func @transform_2(%arg0: i32) -> (i32, i32, i32) {
    %c0_i32 = arith.constant 0 : i32
    %c0_i32_0 = arith.constant 0 : i32
    %c0_i32_1 = arith.constant 0 : i32
    return %arg0, %c0_i32, %c0_i32_0 : i32, i32, i32
  }
  func.func @transform_3(%arg0: i32) -> (i32, i32) {
    %c0_i32 = arith.constant 0 : i32
    %c0_i32_0 = arith.constant 0 : i32
    %c0_i32_1 = arith.constant 0 : i32
    return %c0_i32, %c0_i32_0 : i32, i32
  }
  func.func @transform_4(%arg0: i32) -> (i32, i32) {
    %c0_i32 = arith.constant 0 : i32
    %c0_i32_0 = arith.constant 0 : i32
    %c0_i32_1 = arith.constant 0 : i32
    return %c0_i32, %c0_i32_0 : i32, i32
  }
  func.func @transform_5(%arg0: i32) -> (i32, i32) {
    %c0_i32 = arith.constant 0 : i32
    %c0_i32_0 = arith.constant 0 : i32
    %c0_i32_1 = arith.constant 0 : i32
    return %c0_i32, %c0_i32_0 : i32, i32
  }
  func.func @transform_6(%arg0: i32) -> (i32, i32, i32) {
    %c0_i32 = arith.constant 0 : i32
    %c0_i32_0 = arith.constant 0 : i32
    %c0_i32_1 = arith.constant 0 : i32
    return %arg0, %c0_i32, %c0_i32_0 : i32, i32, i32
  }
}

</mosaic_0001>

<llo_original>
// kernel: tpu_custom_call.1
$region0: #{tpu_custom_call.1}
  #allocation0 [shape = 'u32[]', space=smem, size = 0x4, offset = 0x4, fixed_abs, tag = 'smem constant byte address 0x4 - core index']
  #allocation1 [shape = 'u32[144,128]{1,0:T(1,128)}', space=vmem, size = 0x12000, scoped, tag = 'internal scratch']
  %s0 = inlined_call_operand.hbm [shape: bf16[16,32], index: 0, kind: input, shape index: {}]
  %s1 = inlined_call_operand.vmem [shape: bf16[2,1,32], index: 1, kind: input, shape index: {}]
  %s2 = inlined_call_operand.vmem [shape: f32[2,1,8], index: 2, kind: input, shape index: {}]
  %s3 = inlined_call_operand.hbm [shape: bf16[32,96], index: 3, kind: input, shape index: {}]
  %s4 = inlined_call_operand.vmem [shape: bf16[32,128], index: 4, kind: input, shape index: {}]
  %s5 = inlined_call_operand.vmem [shape: f32[4,128], index: 5, kind: input, shape index: {}]
  %s6 = inlined_call_operand.hbm [shape: f32[2,1,128], index: 6, kind: output, shape index: {}]
  %s7 = sld [smem:[#allocation0]]
  $region65: #{tpu_custom_call.1} parent=0
    _
  %s9 = ssub.s32 1, %s7
  %s10 = scalar_select 0, %s9, %s7
  $region1: #{tpu_custom_call.1} parent=0
    #allocation2 [shape = 'u8[4096]{0}', space=vmem, size = 0x1000, scoped, tag = 'input window, operand 0']
    #allocation3 [shape = 's32[2]{0}', space=sflag, size = 0x8, scoped, tag = 'scoped memory for tpu_custom_call.1']
    #allocation4 [shape = 's32[2]{0}', space=sflag, size = 0x8, scoped, tag = 'scoped memory for tpu_custom_call.1']
    #allocation5 [shape = 'u8[8192]{0}', space=vmem, size = 0x2000, scoped, tag = 'input window, operand 3, single buffered']
    #allocation6 [shape = 's32[1]{0}', space=sflag, size = 0x4, scoped, tag = 'scoped memory for tpu_custom_call.1']
    #allocation7 [shape = 'u8[1024]{0}', space=vmem, size = 0x400, scoped, tag = 'output window, operand 0']
    %11 = vsyncpa [#allocation3], 0
    %s12 = scalar_lea.sflag [#allocation3], 1
    %13 = vsyncpa %s12, 0
    %14 = vsyncpa [#allocation6], 0
    %15 = vsyncpa [#allocation4], 0
    %s16 = scalar_lea.sflag [#allocation4], 1
    %17 = vsyncpa %s16, 0
    loop: start=0, step=1, limit=4
    $region2: #{tpu_custom_call.1} parent=1 // loop_pre_header
      _
    $region3: #{tpu_custom_call.1} parent=1 // loop_header
      %s19 = sphi 0, %s23
      %p20 = scmp.ge.s32.totalorder %s19, 4
      %s29 = sphi 0, %s31
      %s32 = sphi 0, %s29
      %s33 = sphi 0, %s32
      %s49 = sphi 0, %s33
      %s55 = sphi 0, %s57
      %s58 = sphi 0, %s55
      %s59 = sphi 0, %s58
      %s75 = sphi 0, %s59
      %s81 = sphi 0, %s83
      %s84 = sphi 0, %s81
      %s85 = sphi 0, %s84
      %s101 = sphi 0, %s85
      %s105 = sphi 0, %s105
      %s107 = sphi 0, %s105
      %s108 = sphi 0, %s107
      %s122 = sphi 0, %s108
      %s126 = sphi 0, %s126
      %s128 = sphi 0, %s126
      %s129 = sphi 0, %s128
      %s143 = sphi 0, %s129
      %s147 = sphi 0, %s147
      %s149 = sphi 0, %s147
      %s150 = sphi 0, %s149
      %s164 = sphi 0, %s150
      %s170 = sphi 0, %s172
      %s173 = sphi 0, %s170
      %s174 = sphi 0, %s173
      %s190 = sphi 0, %s174
    $region4: #{tpu_custom_call.1} parent=1 // loop_header_branch
      %22 = sbr.rel (%p20) target = $region8
    $region5: #{tpu_custom_call.1} parent=1 // loop_body
      %s24 = ssub.s32 %s19, 1
      %s25 = ssub.s32 %s19, 2
      %s26 = sadd.s32 %s19, 1
      %s27 = ssub.s32 %s19, %s26
      %p28 = scmp.eq.s32.totalorder %s27, 0
      %s30 = sadd.s32 %s29, 1
      %s31 = scalar_select %p28, %s29, %s30
      %p34 = pneg %p28
      %p35 = scmp.eq.s32.totalorder %s19, 1
      %p36 = por %p34, %p35
      %p37 = scmp.ne.s32.totalorder %s29, %s32
      %p38 = scmp.eq.s32.totalorder %s19, 0
      %p39 = por %p37, %p38
      %p40 = scmp.ne.s32.totalorder %s29, %s32
      %p41 = scmp.eq.s32.totalorder %s24, 1
      %p42 = por %p40, %p41
      %p43 = scmp.ne.s32.totalorder %s32, %s33
      %p44 = scmp.eq.s32.totalorder %s24, 0
      %p45 = por %p43, %p44
      %p46 = scmp.ne.s32.totalorder %s32, %s33
      %p47 = scmp.eq.s32.totalorder %s25, 1
      %p48 = por %p46, %p47
      %p50 = scmp.ne.s32.totalorder %s33, %s49
      %p51 = scmp.eq.s32.totalorder %s25, 0
      %p52 = por %p50, %p51
      %s53 = ssub.s32 %s19, %s26
      %p54 = scmp.eq.s32.totalorder %s53, 0
      %s56 = sadd.s32 %s55, 1
      %s57 = scalar_select %p54, %s55, %s56
      %p60 = pneg %p54
      %p61 = scmp.eq.s32.totalorder %s19, 1
      %p62 = por %p60, %p61
      %p63 = scmp.ne.s32.totalorder %s55, %s58
      %p64 = scmp.eq.s32.totalorder %s19, 0
      %p65 = por %p63, %p64
      %p66 = scmp.ne.s32.totalorder %s55, %s58
      %p67 = scmp.eq.s32.totalorder %s24, 1
      %p68 = por %p66, %p67
      %p69 = scmp.ne.s32.totalorder %s58, %s59
      %p70 = scmp.eq.s32.totalorder %s24, 0
      %p71 = por %p69, %p70
      %p72 = scmp.ne.s32.totalorder %s58, %s59
      %p73 = scmp.eq.s32.totalorder %s25, 1
      %p74 = por %p72, %p73
      %p76 = scmp.ne.s32.totalorder %s59, %s75
      %p77 = scmp.eq.s32.totalorder %s25, 0
      %p78 = por %p76, %p77
      %s79 = ssub.s32 %s19, %s26
      %p80 = scmp.eq.s32.totalorder %s79, 0
      %s82 = sadd.s32 %s81, 1
      %s83 = scalar_select %p80, %s81, %s82
      %p86 = pneg %p80
      %p87 = scmp.eq.s32.totalorder %s19, 1
      %p88 = por %p86, %p87
      %p89 = scmp.ne.s32.totalorder %s81, %s84
      %p90 = scmp.eq.s32.totalorder %s19, 0
      %p91 = por %p89, %p90
      %p92 = scmp.ne.s32.totalorder %s81, %s84
      %p93 = scmp.eq.s32.totalorder %s24, 1
      %p94 = por %p92, %p93
      %p95 = scmp.ne.s32.totalorder %s84, %s85
      %p96 = scmp.eq.s32.totalorder %s24, 0
      %p97 = por %p95, %p96
      %p98 = scmp.ne.s32.totalorder %s84, %s85
      %p99 = scmp.eq.s32.totalorder %s25, 1
      %p100 = por %p98, %p99
      %p102 = scmp.ne.s32.totalorder %s85, %s101
      %p103 = scmp.eq.s32.totalorder %s25, 0
      %p104 = por %p102, %p103
      %s106 = sadd.s32 %s105, 1
      %p109 = scmp.eq.s32.totalorder %s19, 1
      %p110 = scmp.ne.s32.totalorder %s105, %s107
      %p111 = scmp.eq.s32.totalorder %s19, 0
      %p112 = por %p110, %p111
      %p113 = scmp.ne.s32.totalorder %s105, %s107
      %p114 = scmp.eq.s32.totalorder %s24, 1
      %p115 = por %p113, %p114
      %p116 = scmp.ne.s32.totalorder %s107, %s108
      %p117 = scmp.eq.s32.totalorder %s24, 0
      %p118 = por %p116, %p117
      %p119 = scmp.ne.s32.totalorder %s107, %s108
      %p120 = scmp.eq.s32.totalorder %s25, 1
      %p121 = por %p119, %p120
      %p123 = scmp.ne.s32.totalorder %s108, %s122
      %p124 = scmp.eq.s32.totalorder %s25, 0
      %p125 = por %p123, %p124
      %s127 = sadd.s32 %s126, 1
      %p130 = scmp.eq.s32.totalorder %s19, 1
      %p131 = scmp.ne.s32.totalorder %s126, %s128
      %p132 = scmp.eq.s32.totalorder %s19, 0
      %p133 = por %p131, %p132
      %p134 = scmp.ne.s32.totalorder %s126, %s128
      %p135 = scmp.eq.s32.totalorder %s24, 1
      %p136 = por %p134, %p135
      %p137 = scmp.ne.s32.totalorder %s128, %s129
      %p138 = scmp.eq.s32.totalorder %s24, 0
      %p139 = por %p137, %p138
      %p140 = scmp.ne.s32.totalorder %s128, %s129
      %p141 = scmp.eq.s32.totalorder %s25, 1
      %p142 = por %p140, %p141
      %p144 = scmp.ne.s32.totalorder %s129, %s143
      %p145 = scmp.eq.s32.totalorder %s25, 0
      %p146 = por %p144, %p145
      %s148 = sadd.s32 %s147, 1
      %p151 = scmp.eq.s32.totalorder %s19, 1
      %p152 = scmp.ne.s32.totalorder %s147, %s149
      %p153 = scmp.eq.s32.totalorder %s19, 0
      %p154 = por %p152, %p153
      %p155 = scmp.ne.s32.totalorder %s147, %s149
      %p156 = scmp.eq.s32.totalorder %s24, 1
      %p157 = por %p155, %p156
      %p158 = scmp.ne.s32.totalorder %s149, %s150
      %p159 = scmp.eq.s32.totalorder %s24, 0
      %p160 = por %p158, %p159
      %p161 = scmp.ne.s32.totalorder %s149, %s150
      %p162 = scmp.eq.s32.totalorder %s25, 1
      %p163 = por %p161, %p162
      %p165 = scmp.ne.s32.totalorder %s150, %s164
      %p166 = scmp.eq.s32.totalorder %s25, 0
      %p167 = por %p165, %p166
      %s168 = ssub.s32 %s19, %s26
      %p169 = scmp.eq.s32.totalorder %s168, 0
      %s171 = sadd.s32 %s170, 1
      %s172 = scalar_select %p169, %s170, %s171
      %p175 = pneg %p169
      %p176 = scmp.eq.s32.totalorder %s19, 1
      %p177 = por %p175, %p176
      %p178 = scmp.ne.s32.totalorder %s170, %s173
      %p179 = scmp.eq.s32.totalorder %s19, 0
      %p180 = por %p178, %p179
      %p181 = scmp.ne.s32.totalorder %s170, %s173
      %p182 = scmp.eq.s32.totalorder %s24, 1
      %p183 = por %p181, %p182
      %p184 = scmp.ne.s32.totalorder %s173, %s174
      %p185 = scmp.eq.s32.totalorder %s24, 0
      %p186 = por %p184, %p185
      %p187 = scmp.ne.s32.totalorder %s173, %s174
      %p188 = scmp.eq.s32.totalorder %s25, 1
      %p189 = por %p187, %p188
      %p191 = scmp.ne.s32.totalorder %s174, %s190
      %p192 = scmp.eq.s32.totalorder %s25, 0
      %p193 = por %p191, %p192
      %p194 = scmp.le.s32.totalorder 1, %s19
      %p195 = scmp.lt.s32.totalorder %s19, 3
      %p196 = pnand %p194, %p195
      %p197 = pneg %p196
      // Predicated region
      $region9: #{tpu_custom_call.1} parent=5 // pred_check
        _
      $region10: #{tpu_custom_call.1} parent=5 // pred_check_branch
        %199 = sbr.rel (%p196) target = $region12
      $region11: #{tpu_custom_call.1} parent=5 // pred_region
        %s200 = ssub.s32 %s19, 1
        // Predicated region
        $region13: #{tpu_custom_call.1} parent=11 // pred_check
          %p201 = pneg %p118
        $region14: #{tpu_custom_call.1} parent=11 // pred_check_branch
          %203 = sbr.rel (%p201) target = $region16
        $region15: #{tpu_custom_call.1} parent=11 // pred_region
          %s205 = ssub.s32 256, 256
          %206 = vsyncadd [#allocation6], %s205
          %s207 = sshll.u32 [#allocation5], 4
          %s208 = int_to_ptr.vmem [resolvable:$true] %s207
          %213 = dma.hbm_to_vmem [thread:$0]  %s3, 256, %s208, [#allocation6], 64, 64, 4
        $region16: #{tpu_custom_call.1} parent=11 // pred_fallthru
          _
        // Predicated region
        $region17: #{tpu_custom_call.1} parent=11 // pred_check
          %p214 = pneg %p139
        $region18: #{tpu_custom_call.1} parent=11 // pred_check_branch
          %216 = sbr.rel (%p214) target = $region20
        $region19: #{tpu_custom_call.1} parent=11 // pred_region
          _
        $region20: #{tpu_custom_call.1} parent=11 // pred_fallthru
          _
        // Predicated region
        $region21: #{tpu_custom_call.1} parent=11 // pred_check
          %p217 = pneg %p160
        $region22: #{tpu_custom_call.1} parent=11 // pred_check_branch
          %219 = sbr.rel (%p217) target = $region24
        $region23: #{tpu_custom_call.1} parent=11 // pred_region
          _
        $region24: #{tpu_custom_call.1} parent=11 // pred_fallthru
          _
      $region12: #{tpu_custom_call.1} parent=5 // pred_fallthru
        _
      %p220 = scmp.lt.s32.totalorder %s19, 2
      // Predicated region
      $region25: #{tpu_custom_call.1} parent=5 // pred_check
        %p221 = pneg %p220
      $region26: #{tpu_custom_call.1} parent=5 // pred_check_branch
        %223 = sbr.rel (%p221) target = $region28
      $region27: #{tpu_custom_call.1} parent=5 // pred_region
        // Predicated region
        $region29: #{tpu_custom_call.1} parent=27 // pred_check
          %p224 = pneg %p39
        $region30: #{tpu_custom_call.1} parent=27 // pred_check_branch
          %226 = sbr.rel (%p224) target = $region32
        $region31: #{tpu_custom_call.1} parent=27 // pred_region
          %s227 = sand.u32 %s29, 1
          %s228 = scalar_lea.sflag [#allocation3], %s227
          %s229 = sand.u32 %s29, 1
          %s230 = smul.addr %s229, 4
          %s231 = scalar_lea.vmem [#allocation2], %s230
          %s233 = ssub.s32 64, 64
          %234 = vsyncadd %s228, %s233
          %s235 = smul.addr %s19, 64
          %s236 = scalar_lea.hbm %s0, %s235
          %s238 = sshll.u32 %s231, 4
          %s239 = int_to_ptr.vmem [resolvable:$true] %s238
          %241 = dma.hbm_to_vmem [thread:$0]  %s236, 64, %s239, %s228
        $region32: #{tpu_custom_call.1} parent=27 // pred_fallthru
          _
        // Predicated region
        $region33: #{tpu_custom_call.1} parent=27 // pred_check
          %p242 = pneg %p65
        $region34: #{tpu_custom_call.1} parent=27 // pred_check_branch
          %244 = sbr.rel (%p242) target = $region36
        $region35: #{tpu_custom_call.1} parent=27 // pred_region
          %p245 = scmp.lt.s32.totalorder %s19, 1
          %s246 = scalar_select %p245, %s19, 1
          %s247 = scalar_lea.vmem %s1, %s246
        $region36: #{tpu_custom_call.1} parent=27 // pred_fallthru
          _
        // Predicated region
        $region37: #{tpu_custom_call.1} parent=27 // pred_check
          %p248 = pneg %p91
        $region38: #{tpu_custom_call.1} parent=27 // pred_check_branch
          %250 = sbr.rel (%p248) target = $region40
        $region39: #{tpu_custom_call.1} parent=27 // pred_region
          %p251 = scmp.lt.s32.totalorder %s19, 1
          %s252 = scalar_select %p251, %s19, 1
          %s253 = scalar_lea.vmem %s2, %s252
        $region40: #{tpu_custom_call.1} parent=27 // pred_fallthru
          _
      $region28: #{tpu_custom_call.1} parent=5 // pred_fallthru
        _
      %p254 = scmp.le.s32.totalorder 1, %s19
      %p255 = scmp.lt.s32.totalorder %s19, 3
      %p256 = pnand %p254, %p255
      %p257 = pneg %p256
      // Predicated region
      $region41: #{tpu_custom_call.1} parent=5 // pred_check
        _
      $region42: #{tpu_custom_call.1} parent=5 // pred_check_branch
        %259 = sbr.rel (%p256) target = $region44
      $region43: #{tpu_custom_call.1} parent=5 // pred_region
        %s260 = ssub.s32 %s19, 1
        %s261 = sand.u32 %s32, 1
        %s262 = scalar_lea.sflag [#allocation3], %s261
        %s263 = sand.u32 %s32, 1
        %s264 = smul.addr %s263, 4
        %s265 = scalar_lea.vmem [#allocation2], %s264
        // Predicated region
        $region45: #{tpu_custom_call.1} parent=43 // pred_check
          %p266 = pneg %p45
        $region46: #{tpu_custom_call.1} parent=43 // pred_check_branch
          %268 = sbr.rel (%p266) target = $region48
        $region47: #{tpu_custom_call.1} parent=43 // pred_region
          %269 = dma.done %s262, 64
        $region48: #{tpu_custom_call.1} parent=43 // pred_fallthru
          _
        // Predicated region
        $region49: #{tpu_custom_call.1} parent=43 // pred_check
          %p270 = pneg %p118
        $region50: #{tpu_custom_call.1} parent=43 // pred_check_branch
          %272 = sbr.rel (%p270) target = $region52
        $region51: #{tpu_custom_call.1} parent=43 // pred_region
          %273 = dma.done [#allocation6], 256
        $region52: #{tpu_custom_call.1} parent=43 // pred_fallthru
          _
        %s274 = sand.u32 %s32, 1
        %s275 = scalar_lea.sflag [#allocation3], %s274
        %s276 = sand.u32 %s32, 1
        %s277 = smul.addr %s276, 4
        %s278 = scalar_lea.vmem [#allocation2], %s277
        %p279 = pneg %p45
        %p280 = pneg %p42
        %p281 = scmp.lt.s32.totalorder %s24, 1
        %s282 = scalar_select %p281, %s24, 1
        %s283 = scalar_lea.vmem %s1, %s282
        %p284 = pneg %p71
        %p285 = pneg %p68
        %p286 = scmp.lt.s32.totalorder %s24, 1
        %s287 = scalar_select %p286, %s24, 1
        %s288 = scalar_lea.vmem %s2, %s287
        %p289 = pneg %p97
        %p290 = pneg %p94
        %p291 = pneg %p118
        %p292 = pneg %p115
        %p293 = pneg %p139
        %p294 = pneg %p136
        %p295 = pneg %p160
        %p296 = pneg %p157
        %p297 = pneg %p186
        %p298 = pneg %p183
        %s299 = sand.u32 %s173, 1
        %s300 = scalar_lea.sflag [#allocation4], %s299
        %s301 = sand.u32 %s173, 1
        %s302 = scalar_lea.vmem [#allocation7], %s301
        %p303 = scmp.lt.s32.totalorder %s24, 1
        %s304 = scalar_select %p303, %s24, 1
        %s305 = scalar_lea.vmem %s1, %s304
        %p306 = scmp.lt.s32.totalorder %s24, 1
        %s307 = scalar_select %p306, %s24, 1
        %s308 = scalar_lea.vmem %s2, %s307
        %v310 = vld [vmem:[%s265] sm:$0xf]
        %v311 = vld [vmem:[#allocation5] sm:$0xf]
        %v312 = vld [vmem:[#allocation5 + $0x4] sm:$0xf]
        %v313 = vld [vmem:[#allocation5 + $0x8] sm:$0xf]
        %v314 = vld [vmem:[#allocation5 + $0xc] sm:$0xf]
        %v315 = vld [vmem:[%s5] sm:$0x1]
        %v316 = vlaneseq
        %v317 = vshrl.u32 %v316, 7
        %v318 = vsub.s32 0, %v317
        %v319 = vrot.slane %v315, %v318
        %v324 = vunpack.c.l.b16 %v311
        %v325 = vunpack.c.l.b16 %v312
        %v326 = vunpack.c.l.b16 %v313
        %v327 = vunpack.c.l.b16 %v314
        %v328 = vpack.c.b16 %v325, %v324
        %v329 = vpack.c.b16 %v327, %v326
        %vm332 = vcmask 261120
        %v334 = vsel %vm332, %v310, 0
        %336 = vmatprep.subr.bf16.mxu0 0
        %337 = vmatpush1.bf16.msra.mxu0 %v328
        %338 = vmatprep.subr.bf16.mxu0 0
        %339 = vmatpush1.bf16.msra.mxu0 %v329
        %340 = vmatprep.subr.bf16.mxu0 0
        %341 = vmatpush1.bf16.msra.mxu0 0
        %342 = vmatprep.subr.bf16.mxu0 0
        %343 = vmatpush1.bf16.msra.mxu0 0
        %344 = vmatprep.subr.bf16.mxu0 0
        %345 = vmatpush1.bf16.msra.mxu0 0
        %346 = vmatprep.subr.bf16.mxu0 0
        %347 = vmatpush1.bf16.msra.mxu0 0
        %348 = vmatprep.subr.bf16.mxu0 0
        %349 = vmatpush1.bf16.msra.mxu0 0
        %350 = vmatprep.subr.bf16.mxu0 0
        %351 = vmatpush1.bf16.msra.mxu0 0
        %352 = vmatprep.subr.bf16.mxu0 0
        %353 = vmatpush1.bf16.msra.mxu0 0
        %354 = vmatprep.subr.bf16.mxu0 0
        %355 = vmatpush1.bf16.msra.mxu0 0
        %356 = vmatprep.subr.bf16.mxu0 0
        %357 = vmatpush1.bf16.msra.mxu0 0
        %358 = vmatprep.subr.bf16.mxu0 0
        %359 = vmatpush1.bf16.msra.mxu0 0
        %360 = vmatprep.subr.bf16.mxu0 0
        %361 = vmatpush1.bf16.msra.mxu0 0
        %362 = vmatprep.subr.bf16.mxu0 0
        %363 = vmatpush1.bf16.msra.mxu0 0
        %364 = vmatprep.subr.bf16.mxu0 0
        %365 = vmatpush1.bf16.msra.mxu0 0
        %366 = vmatprep.subr.bf16.mxu0 0
        %367 = vmatpush1.bf16.msra.mxu0 0
        %368 = vmatprep.mubr.bf16.mxu0 0
        %369 = vmatmul.mubr.bf16.gmra.mrb[0].mxu0 %v334
        %v370 = vpop.f32.mrb[0].mxu0
        %v371 = vadd.f32 %v319, %v370
        %v372 = vpop.f32.mrb[0].mxu0
        %v373 = vpop.f32.mrb[0].mxu0
        %v374 = vpop.f32.mrb[0].mxu0
        %375 = vdwg.mxu0
        %v376 = vld [vmem:[%s305] sm:$0x1]
        %v377 = vld [vmem:[%s5 + $0x1] sm:$0x1]
        %378 = vrot.lane.b32.xlu0 %v328, 64
        %v379 = vpop.permute.xlu0 %378
        %380 = vrot.lane.b32.xlu0 %v329, 64
        %v381 = vpop.permute.xlu0 %380
        %v385 = vsel %vm332, %v376, 0
        %387 = vmatprep.subr.bf16.mxu0 0
        %388 = vmatpush1.bf16.msra.mxu0 %v379
        %389 = vmatprep.subr.bf16.mxu0 0
        %390 = vmatpush1.bf16.msra.mxu0 %v381
        %391 = vmatprep.subr.bf16.mxu0 0
        %392 = vmatpush1.bf16.msra.mxu0 0
        %393 = vmatprep.subr.bf16.mxu0 0
        %394 = vmatpush1.bf16.msra.mxu0 0
        %395 = vmatprep.subr.bf16.mxu0 0
        %396 = vmatpush1.bf16.msra.mxu0 0
        %397 = vmatprep.subr.bf16.mxu0 0
        %398 = vmatpush1.bf16.msra.mxu0 0
        %399 = vmatprep.subr.bf16.mxu0 0
        %400 = vmatpush1.bf16.msra.mxu0 0
        %401 = vmatprep.subr.bf16.mxu0 0
        %402 = vmatpush1.bf16.msra.mxu0 0
        %403 = vmatprep.subr.bf16.mxu0 0
        %404 = vmatpush1.bf16.msra.mxu0 0
        %405 = vmatprep.subr.bf16.mxu0 0
        %406 = vmatpush1.bf16.msra.mxu0 0
        %407 = vmatprep.subr.bf16.mxu0 0
        %408 = vmatpush1.bf16.msra.mxu0 0
        %409 = vmatprep.subr.bf16.mxu0 0
        %410 = vmatpush1.bf16.msra.mxu0 0
        %411 = vmatprep.subr.bf16.mxu0 0
        %412 = vmatpush1.bf16.msra.mxu0 0
        %413 = vmatprep.subr.bf16.mxu0 0
        %414 = vmatpush1.bf16.msra.mxu0 0
        %415 = vmatprep.subr.bf16.mxu0 0
        %416 = vmatpush1.bf16.msra.mxu0 0
        %417 = vmatprep.subr.bf16.mxu0 0
        %418 = vmatpush1.bf16.msra.mxu0 0
        %419 = vmatprep.mubr.bf16.mxu0 0
        %420 = vmatmul.mubr.bf16.gmra.mrb[0].mxu0 %v385
        %v421 = vpop.f32.mrb[0].mxu0
        %v422 = vadd.f32 %v377, %v421
        %v423 = vpop.f32.mrb[0].mxu0
        %v424 = vpop.f32.mrb[0].mxu0
        %v425 = vpop.f32.mrb[0].mxu0
        %426 = vdwg.mxu0
        %v427 = vpack.c.bf16 %v371, %v371
        %v428 = vpack.c.bf16 %v422, %v422
        %v429 = vld [vmem:[%s308] sm:$0x1]
        %v431 = vsel %vm332, %v428, 0
        %v434 = vsel %vm332, %v427, 0
        %436 = vmatprep.subr.bf16.mxu0 0
        %437 = vmatpush1.bf16.xpose.msra.mxu0 %v434
        %438 = vmatprep.subr.bf16.mxu0 0
        %439 = vmatpush1.bf16.xpose.msra.mxu0 0
        %440 = vmatprep.subr.bf16.mxu0 0
        %441 = vmatpush1.bf16.xpose.msra.mxu0 0
        %442 = vmatprep.subr.bf16.mxu0 0
        %443 = vmatpush1.bf16.xpose.msra.mxu0 0
        %444 = vmatprep.subr.bf16.mxu0 0
        %445 = vmatpush1.bf16.xpose.msra.mxu0 0
        %446 = vmatprep.subr.bf16.mxu0 0
        %447 = vmatpush1.bf16.xpose.msra.mxu0 0
        %448 = vmatprep.subr.bf16.mxu0 0
        %449 = vmatpush1.bf16.xpose.msra.mxu0 0
        %450 = vmatprep.subr.bf16.mxu0 0
        %451 = vmatpush1.bf16.xpose.msra.mxu0 0
        %452 = vmatprep.subr.bf16.mxu0 0
        %453 = vmatpush1.bf16.xpose.msra.mxu0 0
        %454 = vmatprep.subr.bf16.mxu0 0
        %455 = vmatpush1.bf16.xpose.msra.mxu0 0
        %456 = vmatprep.subr.bf16.mxu0 0
        %457 = vmatpush1.bf16.xpose.msra.mxu0 0
        %458 = vmatprep.subr.bf16.mxu0 0
        %459 = vmatpush1.bf16.xpose.msra.mxu0 0
        %460 = vmatprep.subr.bf16.mxu0 0
        %461 = vmatpush1.bf16.xpose.msra.mxu0 0
        %462 = vmatprep.subr.bf16.mxu0 0
        %463 = vmatpush1.bf16.xpose.msra.mxu0 0
        %464 = vmatprep.subr.bf16.mxu0 0
        %465 = vmatpush1.bf16.xpose.msra.mxu0 0
        %466 = vmatprep.subr.bf16.mxu0 0
        %467 = vmatpush1.bf16.xpose.msra.mxu0 0
        %468 = vmatprep.mubr.bf16.mxu0 0
        %469 = vmatmul.mubr.bf16.gmra.mrb[0].mxu0 %v431
        %v470 = vpop.f32.mrb[0].mxu0
        %v471 = vadd.f32 %v429, %v470
        %v472 = vpop.f32.mrb[0].mxu0
        %v473 = vpop.f32.mrb[0].mxu0
        %v474 = vpop.f32.mrb[0].mxu0
        %475 = vdwg.mxu0
        %vm476 = vcmask 57344
        %v477 = vsel %vm476, %v471, -inf
        %478 = vmax.xlane.f32.xlu0 %v477
        %v479 = vpop.xlane.xlu0 %478
        %v480 = vsub.f32 %v471, %v479
        %v481 = vmul.f32 %v480, 1.442695
        %v482 = vpow.pop %v481
        %v483 = vsel %vm476, %v482, 0.0
        %484 = vadd.xlane.f32.xlu0 %v483
        %v485 = vpop.xlane.xlu0 %484
        %v486 = vrcp.pop %v485
        %v487 = vmul.f32 %v482, %v486
        %v488 = vpack.c.bf16 %v487, %v487
        %490 = vrot.lane.b32.xlu0 %v427, 96
        %v491 = vpop.permute.xlu0 %490
        %vm492 = vcmask 64512
        %v494 = vsel %vm492, %v488, 0
        %vm496 = vcmask 1043456
        %v498 = vsel %vm496, %v491, 0
        %500 = vmatprep.subr.bf16.mxu0 0
        %501 = vmatpush1.bf16.msra.mxu0 %v498
        %502 = vmatprep.subr.bf16.mxu0 0
        %503 = vmatpush1.bf16.msra.mxu0 0
        %504 = vmatprep.subr.bf16.mxu0 0
        %505 = vmatpush1.bf16.msra.mxu0 0
        %506 = vmatprep.subr.bf16.mxu0 0
        %507 = vmatpush1.bf16.msra.mxu0 0
        %508 = vmatprep.subr.bf16.mxu0 0
        %509 = vmatpush1.bf16.msra.mxu0 0
        %510 = vmatprep.subr.bf16.mxu0 0
        %511 = vmatpush1.bf16.msra.mxu0 0
        %512 = vmatprep.subr.bf16.mxu0 0
        %513 = vmatpush1.bf16.msra.mxu0 0
        %514 = vmatprep.subr.bf16.mxu0 0
        %515 = vmatpush1.bf16.msra.mxu0 0
        %516 = vmatprep.subr.bf16.mxu0 0
        %517 = vmatpush1.bf16.msra.mxu0 0
        %518 = vmatprep.subr.bf16.mxu0 0
        %519 = vmatpush1.bf16.msra.mxu0 0
        %520 = vmatprep.subr.bf16.mxu0 0
        %521 = vmatpush1.bf16.msra.mxu0 0
        %522 = vmatprep.subr.bf16.mxu0 0
        %523 = vmatpush1.bf16.msra.mxu0 0
        %524 = vmatprep.subr.bf16.mxu0 0
        %525 = vmatpush1.bf16.msra.mxu0 0
        %526 = vmatprep.subr.bf16.mxu0 0
        %527 = vmatpush1.bf16.msra.mxu0 0
        %528 = vmatprep.subr.bf16.mxu0 0
        %529 = vmatpush1.bf16.msra.mxu0 0
        %530 = vmatprep.subr.bf16.mxu0 0
        %531 = vmatpush1.bf16.msra.mxu0 0
        %532 = vmatprep.mubr.bf16.mxu0 0
        %533 = vmatmul.mubr.bf16.gmra.mrb[0].mxu0 %v494
        %v534 = vpop.f32.mrb[0].mxu0
        %v535 = vadd.f32 0.0, %v534
        %v536 = vpop.f32.mrb[0].mxu0
        %v537 = vpop.f32.mrb[0].mxu0
        %v538 = vpop.f32.mrb[0].mxu0
        %539 = vdwg.mxu0
        %vm540 = vcmask 253952
        %v541 = vsel %vm540, %v535, 0.0
        %542 = vadd.xlane.f32.xlu0 %v541
        %v543 = vpop.xlane.xlu0 %542
        %v544 = vrcp.pop 32.0
        %v545 = vmul.f32 %v543, %v544
        %v546 = vsub.f32 %v535, %v545
        %v547 = vmul.f32 %v546, %v546
        %v548 = vsel %vm540, %v547, 0.0
        %549 = vadd.xlane.f32.xlu0 %v548
        %v550 = vpop.xlane.xlu0 %549
        %v551 = vmul.f32 %v550, %v544
        %v552 = vadd.f32 %v551, 1e-06
        %v553 = vrsqrt.pop %v552
        %v554 = vmul.f32 %v546, %v553
        %v555 = vld [vmem:[%s5 + $0x2] sm:$0x1]
        %v556 = vmul.f32 %v554, %v555
        %v557 = vpack.c.bf16 %v556, %v556
        %v558 = vld [vmem:[%s4] sm:$0xf]
        %v559 = vld [vmem:[%s4 + $0x4] sm:$0xf]
        %v560 = vld [vmem:[%s4 + $0x8] sm:$0xf]
        %v561 = vld [vmem:[%s4 + $0xc] sm:$0xf]
        %v562 = vld [vmem:[%s5 + $0x3] sm:$0x1]
        %v567 = vunpack.c.l.b16 %v558
        %v568 = vunpack.c.l.b16 %v559
        %v569 = vunpack.c.l.b16 %v560
        %v570 = vunpack.c.l.b16 %v561
        %v571 = vpack.c.b16 %v568, %v567
        %v572 = vpack.c.b16 %v570, %v569
        %v576 = vsel %vm332, %v557, 0
        %578 = vmatprep.subr.bf16.mxu0 0
        %579 = vmatpush1.bf16.msra.mxu0 %v571
        %580 = vmatprep.subr.bf16.mxu0 0
        %581 = vmatpush1.bf16.msra.mxu0 %v572
        %582 = vmatprep.subr.bf16.mxu0 0
        %583 = vmatpush1.bf16.msra.mxu0 0
        %584 = vmatprep.subr.bf16.mxu0 0
        %585 = vmatpush1.bf16.msra.mxu0 0
        %586 = vmatprep.subr.bf16.mxu0 0
        %587 = vmatpush1.bf16.msra.mxu0 0
        %588 = vmatprep.subr.bf16.mxu0 0
        %589 = vmatpush1.bf16.msra.mxu0 0
        %590 = vmatprep.subr.bf16.mxu0 0
        %591 = vmatpush1.bf16.msra.mxu0 0
        %592 = vmatprep.subr.bf16.mxu0 0
        %593 = vmatpush1.bf16.msra.mxu0 0
        %594 = vmatprep.subr.bf16.mxu0 0
        %595 = vmatpush1.bf16.msra.mxu0 0
        %596 = vmatprep.subr.bf16.mxu0 0
        %597 = vmatpush1.bf16.msra.mxu0 0
        %598 = vmatprep.subr.bf16.mxu0 0
        %599 = vmatpush1.bf16.msra.mxu0 0
        %600 = vmatprep.subr.bf16.mxu0 0
        %601 = vmatpush1.bf16.msra.mxu0 0
        %602 = vmatprep.subr.bf16.mxu0 0
        %603 = vmatpush1.bf16.msra.mxu0 0
        %604 = vmatprep.subr.bf16.mxu0 0
        %605 = vmatpush1.bf16.msra.mxu0 0
        %606 = vmatprep.subr.bf16.mxu0 0
        %607 = vmatpush1.bf16.msra.mxu0 0
        %608 = vmatprep.subr.bf16.mxu0 0
        %609 = vmatpush1.bf16.msra.mxu0 0
        %610 = vmatprep.mubr.bf16.mxu0 0
        %611 = vmatmul.mubr.bf16.gmra.mrb[0].mxu0 %v576
        %v612 = vpop.f32.mrb[0].mxu0
        %v613 = vadd.f32 %v562, %v612
        %v614 = vpop.f32.mrb[0].mxu0
        %v615 = vpop.f32.mrb[0].mxu0
        %v616 = vpop.f32.mrb[0].mxu0
        %617 = vdwg.mxu0
        %618 = vst [vmem:[%s302] sm:$0x1] %v613
        %s619 = sand.u32 %s173, 1
        %s620 = scalar_lea.sflag [#allocation4], %s619
        %s621 = sand.u32 %s173, 1
        %s622 = scalar_lea.vmem [#allocation7], %s621
        // Predicated region
        $region53: #{tpu_custom_call.1} parent=43 // pred_check
          %p623 = pneg %p183
        $region54: #{tpu_custom_call.1} parent=43 // pred_check_branch
          %625 = sbr.rel (%p623) target = $region56
        $region55: #{tpu_custom_call.1} parent=43 // pred_region
          %s627 = ssub.s32 16, 16
          %628 = vsyncadd %s620, %s627
          %s629 = smul.addr %s24, 16
          %s630 = scalar_lea.hbm %s6, %s629
          %s632 = sshll.u32 %s622, 4
          %s633 = int_to_ptr.vmem [resolvable:$true] %s632
          %635 = dma.vmem_to_hbm [thread:$0]  %s633, 16, %s630, %s620
        $region56: #{tpu_custom_call.1} parent=43 // pred_fallthru
          _
      $region44: #{tpu_custom_call.1} parent=5 // pred_fallthru
        _
      %p636 = scmp.le.s32.totalorder 2, %s19
      // Predicated region
      $region57: #{tpu_custom_call.1} parent=5 // pred_check
        %p637 = pneg %p636
      $region58: #{tpu_custom_call.1} parent=5 // pred_check_branch
        %639 = sbr.rel (%p637) target = $region60
      $region59: #{tpu_custom_call.1} parent=5 // pred_region
        %s640 = ssub.s32 %s19, 2
        // Predicated region
        $region61: #{tpu_custom_call.1} parent=59 // pred_check
          %p641 = pneg %p189
        $region62: #{tpu_custom_call.1} parent=59 // pred_check_branch
          %643 = sbr.rel (%p641) target = $region64
        $region63: #{tpu_custom_call.1} parent=59 // pred_region
          %s644 = sand.u32 %s174, 1
          %s645 = scalar_lea.sflag [#allocation4], %s644
          %s646 = sand.u32 %s174, 1
          %s647 = scalar_lea.vmem [#allocation7], %s646
          %648 = dma.done %s645, 16
        $region64: #{tpu_custom_call.1} parent=59 // pred_fallthru
          _
      $region60: #{tpu_custom_call.1} parent=5 // pred_fallthru
        _
    $region6: #{tpu_custom_call.1} parent=1 // loop_footer
      %s23 = sadd.s32 1, %s19
    $region7: #{tpu_custom_call.1} parent=1 // loop_footer_branch
      %18 = sbr.rel target = $region3
    $region8: #{tpu_custom_call.1} parent=1 // loop_exit
      _
    %649 = vsyncpa [#allocation3], 1
    %s650 = scalar_lea.sflag [#allocation3], 1
    %651 = vsyncpa %s650, 1
    %652 = vsyncpa [#allocation6], 1
    %653 = vsyncpa [#allocation4], 1
    %s654 = scalar_lea.sflag [#allocation4], 1
    %655 = vsyncpa %s654, 1

</llo_original>
